<compile_context>
chip_gen: v5e
topology: v5e:2x2
jax: 0.10.0
libtpu: 0.0.40
codegen_flags: <defaults>
</compile_context>

<pallas_src>
import jax
import jax.numpy as jnp
from jax.experimental import pallas as pl
from jax.experimental.pallas import tpu as pltpu


def _copy_kernel(x_ref, o_ref):
    # Pure lane-dense 2D copy: unmasked vld/vst, no relayout, HBM-roofline.
    o_ref[...] = x_ref[...]


def _round_down(v: int, m: int) -> int:
    return (v // m) * m


def _choose_block(dim: int, unit: int, cap_elems: int) -> int:
    """Pick a block size along one axis.

    Full extent when dim <= unit (allowed by the (8,128) rule); otherwise a
    multiple of `unit`, bounded by the dim and by the element budget.
    """
    if dim <= unit:
        return dim
    cap = max(unit, _round_down(cap_elems, unit))
    return max(unit, min(cap, _round_down(dim, unit)))


# ~2 MiB per tile: with default double buffering the kernel holds ~8 MiB of
# VMEM, well under the scoped defaults on v5e (16 MiB) / v6e (32) / v7x (32).
_TARGET_TILE_BYTES = 2 * 1024 * 1024


def flatten(x: jax.Array) -> jax.Array:
    """Pallas equivalent of torch Flatten: (B, ...) -> (B, prod(rest))."""
    B = x.shape[0]
    flat = 1
    for d in x.shape[1:]:
        flat *= d

    # Row-major reshape in the wrapper: free (view) and matches torch
    # .view(B, -1) element order for an NCHW tensor.
    x2 = x.reshape(B, flat)

    itemsize = jnp.dtype(x.dtype).itemsize
    block_f = _choose_block(flat, 128, _TARGET_TILE_BYTES // (8 * itemsize))
    block_b = _choose_block(B, 8, max(1, _TARGET_TILE_BYTES // (block_f * itemsize)))

    grid = (pl.cdiv(B, block_b), pl.cdiv(flat, block_f))

    return pl.pallas_call(
        _copy_kernel,
        out_shape=jax.ShapeDtypeStruct((B, flat), x.dtype),
        grid=grid,
        in_specs=[pl.BlockSpec((block_b, block_f), lambda i, j: (i, j))],
        out_specs=pl.BlockSpec((block_b, block_f), lambda i, j: (i, j)),
        compiler_params=pltpu.CompilerParams(
            dimension_semantics=("parallel", "parallel"),
        ),
    )(x2)


if __name__ == "__main__":
    key = jax.random.PRNGKey(0)
    # Small NCHW input consistent with a conv feature map feeding Flatten.
    x = jax.random.normal(key, (2, 4, 16, 16), dtype=jnp.float32)

    out = flatten(x)
    out = jax.block_until_ready(out)

    # Correctness check against plain JAX reshape (== torch .view(B, -1)).
    ref = x.reshape(x.shape[0], -1)
    assert out.shape == ref.shape, (out.shape, ref.shape)
    assert out.dtype == ref.dtype
    assert jnp.array_equal(out, ref), "Flatten kernel mismatch"

    print("KERNEL_OK")
</pallas_src>

<mosaic_0001>
module attributes {stable_mosaic.version = 11 : i64} {
  func.func @_copy_kernel(%arg0: i32, %arg1: i32, %arg2: memref<2x1024xf32, #tpu.memory_space<vmem>>, %arg3: memref<2x1024xf32, #tpu.memory_space<vmem>>) attributes {dimension_semantics = [#tpu.dimension_semantics<parallel>, #tpu.dimension_semantics<parallel>], iteration_bounds = array<i64: 1, 1>, scalar_prefetch = 0 : i64, scratch_operands = 0 : i64, tpu.core_type = #tpu.core_type<tc>, window_params = [{transform_indices = @transform_0, window_bounds = array<i64: 2, 1024>}, {transform_indices = @transform_1, window_bounds = array<i64: 2, 1024>}]} {
    %c0 = arith.constant 0 : index
    %c0_0 = arith.constant 0 : index
    %0 = vector.load %arg2[%c0, %c0_0] : memref<2x1024xf32, #tpu.memory_space<vmem>>, vector<2x1024xf32>
    %c0_1 = arith.constant 0 : index
    %c0_2 = arith.constant 0 : index
    %1 = vector.load %arg3[%c0_1, %c0_2] : memref<2x1024xf32, #tpu.memory_space<vmem>>, vector<2x1024xf32>
    tpu.vector_store %arg3[%c0_1, %c0_2], %0 {strides = array<i32>} : memref<2x1024xf32, #tpu.memory_space<vmem>>, vector<2x1024xf32>,
    return
  }
  func.func @transform_0(%arg0: i32, %arg1: i32) -> (i32, i32) {
    %c0_i32 = arith.constant 0 : i32
    return %arg0, %arg1 : i32, i32
  }
  func.func @transform_1(%arg0: i32, %arg1: i32) -> (i32, i32) {
    %c0_i32 = arith.constant 0 : i32
    return %arg0, %arg1 : i32, i32
  }
}

</mosaic_0001>

<llo_original>
// kernel: tpu_custom_call.1
$region0: #{tpu_custom_call.1}
  #allocation0 [shape = 'u32[]', space=smem, size = 0x4, offset = 0x4, fixed_abs, tag = 'smem constant byte address 0x4 - core index']
  #allocation1 [shape = 'u32[72,128]{1,0:T(1,128)}', space=vmem, size = 0x9000, scoped, tag = 'internal scratch']
  %s0 = inlined_call_operand.hbm [shape: f32[2,1024], index: 0, kind: input, shape index: {}]
  %s1 = inlined_call_operand.hbm [shape: f32[2,1024], index: 1, kind: output, shape index: {}]
  %s2 = sld [smem:[#allocation0]]
  $region18: #{tpu_custom_call.1} parent=0
    _
  %s4 = ssub.s32 1, %s2
  %s5 = scalar_select 0, %s4, %s2
  $region1: #{tpu_custom_call.1} parent=0
    #allocation2 [shape = 'u8[8192]{0}', space=vmem, size = 0x2000, scoped, tag = 'input window, operand 0, single buffered']
    #allocation3 [shape = 's32[1]{0}', space=sflag, size = 0x4, scoped, tag = 'scoped memory for tpu_custom_call.1']
    #allocation4 [shape = 's32[1]{0}', space=sflag, size = 0x4, scoped, tag = 'scoped memory for tpu_custom_call.1']
    #allocation5 [shape = 'u8[8192]{0}', space=vmem, size = 0x2000, scoped, tag = 'output window, operand 0, single buffered']
    %6 = vsyncpa [#allocation3], 0
    %7 = vsyncpa [#allocation4], 0
    // Predicated region
    $region2: #{tpu_custom_call.1} parent=1 // pred_check
      _
    $region3: #{tpu_custom_call.1} parent=1 // pred_check_branch
      %9 = sbr.rel (0) target = $region5
    $region4: #{tpu_custom_call.1} parent=1 // pred_region
      %11 = vsyncadd [#allocation3], 0
      %s13 = sshll.u32 %s0, 4
      %s14 = int_to_ptr.hbm [resolvable:$true] %s13
      %s15 = sshll.u32 [#allocation2], 4
      %s16 = int_to_ptr.vmem [resolvable:$true] %s15
      %18 = dma.hbm_to_vmem [thread:$0]  %s14, 256, %s16, [#allocation3]
    $region5: #{tpu_custom_call.1} parent=1 // pred_fallthru
      _
    // Predicated region
    $region6: #{tpu_custom_call.1} parent=1 // pred_check
      _
    $region7: #{tpu_custom_call.1} parent=1 // pred_check_branch
      %20 = sbr.rel (0) target = $region9
    $region8: #{tpu_custom_call.1} parent=1 // pred_region
      %22 = dma.done [#allocation3], 256
    $region9: #{tpu_custom_call.1} parent=1 // pred_fallthru
      _
    %v23 = vld [vmem:[#allocation2] sm:$0xff]
    %v24 = vld [vmem:[#allocation2 + $0x8] sm:$0xff]
    %25 = vst [vmem:[#allocation5] sm:$0xff] %v23
    %26 = vst [vmem:[#allocation5 + $0x8] sm:$0xff] %v24
    // Predicated region
    $region10: #{tpu_custom_call.1} parent=1 // pred_check
      _
    $region11: #{tpu_custom_call.1} parent=1 // pred_check_branch
      %28 = sbr.rel (0) target = $region13
    $region12: #{tpu_custom_call.1} parent=1 // pred_region
      %30 = vsyncadd [#allocation4], 0
      %s32 = sshll.u32 [#allocation5], 4
      %s33 = int_to_ptr.vmem [resolvable:$true] %s32
      %s34 = sshll.u32 %s1, 4
      %s35 = int_to_ptr.hbm [resolvable:$true] %s34
      %37 = dma.vmem_to_hbm [thread:$0]  %s33, 256, %s35, [#allocation4]
    $region13: #{tpu_custom_call.1} parent=1 // pred_fallthru
      _
    // Predicated region
    $region14: #{tpu_custom_call.1} parent=1 // pred_check
      _
    $region15: #{tpu_custom_call.1} parent=1 // pred_check_branch
      %39 = sbr.rel (0) target = $region17
    $region16: #{tpu_custom_call.1} parent=1 // pred_region
      %41 = dma.done [#allocation4], 256
    $region17: #{tpu_custom_call.1} parent=1 // pred_fallthru
      _
    %42 = vsyncpa [#allocation3], 1
    %43 = vsyncpa [#allocation4], 1

</llo_original>
